<compile_context>
chip_gen: v5e
topology: v5e:2x2
jax: 0.10.0
libtpu: 0.0.40
codegen_flags: <defaults>
</compile_context>

<pallas_src>
import functools

import jax
import jax.numpy as jnp
from jax.experimental import pallas as pl
from jax.experimental.pallas import tpu as pltpu

EPS = 1e-5


def _residual_block_kernel(x_ref, w1_ref, w2_ref, out_ref, *, H, W, compute_dtype):
    # x_ref  : (1, Cp, H*W)       one image; channels on sublanes, flat spatial on lanes
    # w*_ref : (3, Cp, 3*Cp)      packed weights: (kh, Cout, kw*Cin), kw-major
    # out_ref: (1, Cp, H*W)
    C = x_ref.shape[1]
    HW = H * W

    x = x_ref[0].astype(jnp.float32)                 # (C, HW) — IN/residual math in f32

    # Border masks on the flat spatial (lane) axis: p = h*W + w.
    p_idx = jax.lax.broadcasted_iota(jnp.int32, (1, HW), 1)
    if (W & (W - 1)) == 0:                           # power-of-two fast path
        w_idx = jnp.bitwise_and(p_idx, W - 1)
    else:
        w_idx = jax.lax.rem(p_idx, W)
    h_lo = p_idx >= W                                # row h-1 exists (tap dh = -1)
    h_hi = p_idx < (H - 1) * W                       # row h+1 exists (tap dh = +1)
    w_lo = w_idx >= 1                                # col w-1 exists (tap dw = -1)
    w_hi = w_idx <= W - 2                            # col w+1 exists (tap dw = +1)

    zero = jnp.zeros((), compute_dtype)

    def conv3x3(src_f32, w_ref):
        # src_f32: (Cin, HW) f32  ->  (Cout, HW) f32
        src = src_f32.astype(compute_dtype)
        # 2 lane-rolls + 2 masks on the input, reused by all three kernel rows.
        t_m1 = jnp.where(w_lo, pltpu.roll(src, 1, axis=1), zero)       # x[.., w-1]
        t_p1 = jnp.where(w_hi, pltpu.roll(src, HW - 1, axis=1), zero)  # x[.., w+1]
        t_cat = jnp.concatenate([t_m1, src, t_p1], axis=0)             # (3*Cin, HW)

        # One K = 3*Cin dot per kernel row; the MXU accumulates internally.
        u = [jnp.dot(w_ref[kh].astype(compute_dtype), t_cat,
                     preferred_element_type=jnp.float32)               # (Cout, HW) f32
             for kh in range(3)]

        # 2 row-rolls + 2 masks on the per-row partial sums (dh = -1, +1).
        acc = u[1]                                                      # dh = 0
        acc = acc + jnp.where(h_lo, pltpu.roll(u[0], W, axis=1), 0.0)       # dh = -1
        acc = acc + jnp.where(h_hi, pltpu.roll(u[2], HW - W, axis=1), 0.0)  # dh = +1
        return acc

    def instance_norm(v):
        # Per-channel stats over the spatial (lane) axis, single fused f32 pass.
        mean = jnp.mean(v, axis=1, keepdims=True)
        mean_sq = jnp.mean(v * v, axis=1, keepdims=True)
        var = jnp.maximum(mean_sq - mean * mean, 0.0)   # biased variance
        return (v - mean) * jax.lax.rsqrt(var + EPS)

    h1 = jnp.maximum(instance_norm(conv3x3(x, w1_ref)), 0.0)            # IN + ReLU
    # TODO(synk): train-mode Dropout(0.5) not implemented (inference semantics).
    h2 = instance_norm(conv3x3(h1, w2_ref))
    out_ref[0] = (x + h2).astype(out_ref.dtype)                         # residual add


def _default_vmem_limit_bytes():
    cap = 64 << 20
    try:
        info = pltpu.get_tpu_info()
        cap = int(getattr(info, "vmem_capacity_bytes", cap))
    except Exception:
        pass
    # ~25% headroom for Mosaic internal scratch / DMA buffers:
    # -> ~48 MiB on v7x (64 MiB/TC), 96 MiB on v5e/v6e (128 MiB).
    return min(cap * 3 // 4, 112 << 20)


@functools.partial(jax.jit, static_argnames=("compute_dtype",))
def residual_block(x_nchw, w1_oihw, w2_oihw, *, compute_dtype=jnp.bfloat16):
    N, C, H, W = x_nchw.shape
    HW = H * W
    # Sublane-align channels: 8 for 4-byte compute, 16 for bf16 (packed sublanes),
    # so the Cin-axis concat inside the kernel stays tile-aligned.
    sub = 8 if jnp.dtype(compute_dtype).itemsize >= 4 else 16
    Cp = -(-C // sub) * sub

    x_flat = x_nchw.reshape(N, C, HW)                # free reshape: no transpose, no pad
    if Cp != C:
        pad_c = Cp - C
        x_flat = jnp.pad(x_flat, ((0, 0), (0, pad_c), (0, 0)))
        w1_oihw = jnp.pad(w1_oihw, ((0, pad_c), (0, pad_c), (0, 0), (0, 0)))
        w2_oihw = jnp.pad(w2_oihw, ((0, pad_c), (0, pad_c), (0, 0), (0, 0)))

    # Pack weights to the fused-K layout: (kh, Cout, kw*Cin) with kw-major blocks,
    # matching t_cat = [T_{dw=-1}; T_0; T_{dw=+1}] inside the kernel.
    def pack(w_oihw):
        return (jnp.transpose(w_oihw, (2, 0, 3, 1))       # (kh, O, kw, I)
                .reshape(3, Cp, 3 * Cp)
                .astype(compute_dtype))

    w1p = pack(w1_oihw)
    w2p = pack(w2_oihw)

    kernel = functools.partial(_residual_block_kernel, H=H, W=W,
                               compute_dtype=compute_dtype)

    flops = N * 2 * (2 * 9 * Cp * Cp * HW)               # two 3x3 convs
    transcendentals = N * 2 * Cp                          # one rsqrt per channel per IN
    bytes_accessed = (x_flat.size * x_flat.dtype.itemsize          # input
                      + N * Cp * HW * x_nchw.dtype.itemsize        # output
                      + w1p.size * w1p.dtype.itemsize
                      + w2p.size * w2p.dtype.itemsize)

    out_flat = pl.pallas_call(
        kernel,
        out_shape=jax.ShapeDtypeStruct((N, Cp, HW), x_nchw.dtype),
        grid_spec=pltpu.PrefetchScalarGridSpec(
            num_scalar_prefetch=0,
            grid=(N,),
            in_specs=[
                pl.BlockSpec((1, Cp, HW), lambda n: (n, 0, 0)),
                pl.BlockSpec((3, Cp, 3 * Cp), lambda n: (0, 0, 0)),
                pl.BlockSpec((3, Cp, 3 * Cp), lambda n: (0, 0, 0)),
            ],
            out_specs=pl.BlockSpec((1, Cp, HW), lambda n: (n, 0, 0)),
        ),
        compiler_params=pltpu.CompilerParams(
            dimension_semantics=("parallel",),
            vmem_limit_bytes=_default_vmem_limit_bytes(),
        ),
        cost_estimate=pl.CostEstimate(
            flops=flops,
            transcendentals=transcendentals,
            bytes_accessed=bytes_accessed,
        ),
        # TODO(synk): for N == 1 on v7x add a second "parallel" grid axis over
        # H-strips (1-row halo via manual DMA) so both TensorCores get work and
        # the per-step block stays small at 128x128 feature maps.
    )(x_flat, w1p, w2p)

    out = out_flat[:, :C, :] if Cp != C else out_flat
    return out.reshape(N, C, H, W)


def _reference(x_nchw, w1_oihw, w2_oihw):
    """Pure-JAX reference matching PyTorch semantics (eval mode)."""
    def conv(x, w):
        return jax.lax.conv_general_dilated(
            x, w, window_strides=(1, 1), padding=((1, 1), (1, 1)),
            dimension_numbers=("NCHW", "OIHW", "NCHW"))

    def inorm(x):
        mean = jnp.mean(x, axis=(2, 3), keepdims=True)
        var = jnp.mean((x - mean) ** 2, axis=(2, 3), keepdims=True)
        return (x - mean) * jax.lax.rsqrt(var + EPS)

    h = jax.nn.relu(inorm(conv(x_nchw, w1_oihw)))
    h = inorm(conv(h, w2_oihw))
    return x_nchw + h


if __name__ == "__main__":
    N, C, H, W = 2, 4, 16, 16   # in_features = 4

    key = jax.random.PRNGKey(0)
    kx, k1, k2 = jax.random.split(key, 3)
    x = jax.random.normal(kx, (N, C, H, W), dtype=jnp.float32)
    # PyTorch Conv2d weight shape: (out_ch, in_ch, kh, kw); bias=False
    w1 = 0.1 * jax.random.normal(k1, (C, C, 3, 3), dtype=jnp.float32)
    w2 = 0.1 * jax.random.normal(k2, (C, C, 3, 3), dtype=jnp.float32)

    ref = jax.block_until_ready(_reference(x, w1, w2))

    # 1) f32 MXU path: bit-tight structural check of the separable / K-fused conv.
    out_f32 = jax.block_until_ready(residual_block(x, w1, w2, compute_dtype=jnp.float32))
    assert out_f32.shape == (N, C, H, W)
    err_f32 = float(jnp.max(jnp.abs(out_f32 - ref)))
    assert err_f32 < 1e-4, err_f32

    # 2) Default bf16 MXU operands (f32 accumulation / IN math): relaxed tolerance.
    out_bf16 = jax.block_until_ready(residual_block(x, w1, w2))
    err_bf16 = float(jnp.max(jnp.abs(out_bf16 - ref)))
    assert err_bf16 < 1e-1, err_bf16

    # 3) bf16 HBM I/O (halves in/out DMA): compare against the bf16-quantized input.
    x_bf16 = x.astype(jnp.bfloat16)
    out_io = jax.block_until_ready(residual_block(x_bf16, w1, w2))
    ref_io = jax.block_until_ready(_reference(x_bf16.astype(jnp.float32), w1, w2))
    err_io = float(jnp.max(jnp.abs(out_io.astype(jnp.float32) - ref_io)))
    assert err_io < 1.5e-1, err_io

    print("KERNEL_OK")
</pallas_src>

<mosaic_0001>
module attributes {stable_mosaic.version = 11 : i64} {
  func.func @_residual_block_kernel(%arg0: i32, %arg1: memref<1x8x256xf32, #tpu.memory_space<vmem>>, %arg2: memref<3x8x24xf32, #tpu.memory_space<vmem>>, %arg3: memref<3x8x24xf32, #tpu.memory_space<vmem>>, %arg4: memref<1x8x256xf32, #tpu.memory_space<vmem>>) attributes {dimension_semantics = [#tpu.dimension_semantics<parallel>], iteration_bounds = array<i64: 2>, scalar_prefetch = 0 : i64, scratch_operands = 0 : i64, tpu.core_type = #tpu.core_type<tc>, window_params = [{transform_indices = @transform_0, window_bounds = array<i64: 1, 8, 256>}, {pipeline_mode = #tpu.pipeline_mode<synchronous>, transform_indices = @transform_1, window_bounds = array<i64: 3, 8, 24>}, {pipeline_mode = #tpu.pipeline_mode<synchronous>, transform_indices = @transform_2, window_bounds = array<i64: 3, 8, 24>}, {transform_indices = @transform_3, window_bounds = array<i64: 1, 8, 256>}]} {
    %c0 = arith.constant 0 : index
    %c0_0 = arith.constant 0 : index
    %c0_1 = arith.constant 0 : index
    %0 = vector.load %arg1[%c0, %c0_0, %c0_1] : memref<1x8x256xf32, #tpu.memory_space<vmem>>, vector<1x8x256xf32>
    %1 = vector.shape_cast %0 : vector<1x8x256xf32> to vector<8x256xf32>
    %2 = tpu.iota {dimensions = array<i32: 1>} : vector<1x256xi32>
    %c15_i32 = arith.constant 15 : i32
    %3 = vector.broadcast %c15_i32 : i32 to vector<1x256xi32>
    %4 = arith.andi %2, %3 : vector<1x256xi32>
    %c16_i32 = arith.constant 16 : i32
    %5 = vector.broadcast %c16_i32 : i32 to vector<1x256xi32>
    %6 = arith.cmpi sge, %2, %5 : vector<1x256xi32>
    %c240_i32 = arith.constant 240 : i32
    %7 = vector.broadcast %c240_i32 : i32 to vector<1x256xi32>
    %8 = arith.cmpi slt, %2, %7 : vector<1x256xi32>
    %c1_i32 = arith.constant 1 : i32
    %9 = vector.broadcast %c1_i32 : i32 to vector<1x256xi32>
    %10 = arith.cmpi sge, %4, %9 : vector<1x256xi32>
    %c14_i32 = arith.constant 14 : i32
    %11 = vector.broadcast %c14_i32 : i32 to vector<1x256xi32>
    %12 = arith.cmpi sle, %4, %11 : vector<1x256xi32>
    %c1_i32_2 = arith.constant 1 : i32
    %13 = tpu.dynamic_rotate %1 by %c1_i32_2 dim 1 : vector<8x256xf32>, i32 -> vector<8x256xf32>
    %cst = arith.constant 0.000000e+00 : f32
    %14 = vector.shape_cast %10 : vector<1x256xi1> to vector<1x256xi1>
    %15 = vector.broadcast %14 : vector<1x256xi1> to vector<8x256xi1>
    %16 = vector.broadcast %cst : f32 to vector<8x256xf32>
    %17 = arith.select %15, %13, %16 : vector<8x256xi1>, vector<8x256xf32>
    %c255_i32 = arith.constant 255 : i32
    %18 = tpu.dynamic_rotate %1 by %c255_i32 dim 1 : vector<8x256xf32>, i32 -> vector<8x256xf32>
    %cst_3 = arith.constant 0.000000e+00 : f32
    %19 = vector.shape_cast %12 : vector<1x256xi1> to vector<1x256xi1>
    %20 = vector.broadcast %19 : vector<1x256xi1> to vector<8x256xi1>
    %21 = vector.broadcast %cst_3 : f32 to vector<8x256xf32>
    %22 = arith.select %20, %18, %21 : vector<8x256xi1>, vector<8x256xf32>
    %23 = tpu.concatenate %17, %1, %22 in 0 : vector<8x256xf32>, vector<8x256xf32>, vector<8x256xf32> -> vector<24x256xf32>
    %c0_4 = arith.constant 0 : index
    %c0_5 = arith.constant 0 : index
    %c0_6 = arith.constant 0 : index
    %24 = vector.load %arg2[%c0_4, %c0_5, %c0_6] : memref<3x8x24xf32, #tpu.memory_space<vmem>>, vector<1x8x24xf32>
    %25 = vector.shape_cast %24 : vector<1x8x24xf32> to vector<8x24xf32>
    %cst_7 = arith.constant dense<0.000000e+00> : vector<8x256xf32>
    %26 = tpu.matmul %25, %23, %cst_7 {dimension_numbers = #tpu.dot_dimension_numbers<[1], [0], [0], [1], [0, 0, 1, 1], [], []>} : vector<8x24xf32>, vector<24x256xf32>, vector<8x256xf32> -> vector<8x256xf32>
    %c1 = arith.constant 1 : index
    %c0_8 = arith.constant 0 : index
    %c0_9 = arith.constant 0 : index
    %27 = vector.load %arg2[%c1, %c0_8, %c0_9] : memref<3x8x24xf32, #tpu.memory_space<vmem>>, vector<1x8x24xf32>
    %28 = vector.shape_cast %27 : vector<1x8x24xf32> to vector<8x24xf32>
    %cst_10 = arith.constant dense<0.000000e+00> : vector<8x256xf32>
    %29 = tpu.matmul %28, %23, %cst_10 {dimension_numbers = #tpu.dot_dimension_numbers<[1], [0], [0], [1], [0, 0, 1, 1], [], []>} : vector<8x24xf32>, vector<24x256xf32>, vector<8x256xf32> -> vector<8x256xf32>
    %c2 = arith.constant 2 : index
    %c0_11 = arith.constant 0 : index
    %c0_12 = arith.constant 0 : index
    %30 = vector.load %arg2[%c2, %c0_11, %c0_12] : memref<3x8x24xf32, #tpu.memory_space<vmem>>, vector<1x8x24xf32>
    %31 = vector.shape_cast %30 : vector<1x8x24xf32> to vector<8x24xf32>
    %cst_13 = arith.constant dense<0.000000e+00> : vector<8x256xf32>
    %32 = tpu.matmul %31, %23, %cst_13 {dimension_numbers = #tpu.dot_dimension_numbers<[1], [0], [0], [1], [0, 0, 1, 1], [], []>} : vector<8x24xf32>, vector<24x256xf32>, vector<8x256xf32> -> vector<8x256xf32>
    %c16_i32_14 = arith.constant 16 : i32
    %33 = tpu.dynamic_rotate %26 by %c16_i32_14 dim 1 : vector<8x256xf32>, i32 -> vector<8x256xf32>
    %cst_15 = arith.constant 0.000000e+00 : f32
    %34 = vector.shape_cast %6 : vector<1x256xi1> to vector<1x256xi1>
    %35 = vector.broadcast %34 : vector<1x256xi1> to vector<8x256xi1>
    %36 = vector.broadcast %cst_15 : f32 to vector<8x256xf32>
    %37 = arith.select %35, %33, %36 : vector<8x256xi1>, vector<8x256xf32>
    %38 = arith.addf %29, %37 : vector<8x256xf32>
    %c240_i32_16 = arith.constant 240 : i32
    %39 = tpu.dynamic_rotate %32 by %c240_i32_16 dim 1 : vector<8x256xf32>, i32 -> vector<8x256xf32>
    %cst_17 = arith.constant 0.000000e+00 : f32
    %40 = vector.shape_cast %8 : vector<1x256xi1> to vector<1x256xi1>
    %41 = vector.broadcast %40 : vector<1x256xi1> to vector<8x256xi1>
    %42 = vector.broadcast %cst_17 : f32 to vector<8x256xf32>
    %43 = arith.select %41, %39, %42 : vector<8x256xi1>, vector<8x256xf32>
    %44 = arith.addf %38, %43 : vector<8x256xf32>
    %cst_18 = arith.constant dense<0.000000e+00> : vector<8xf32>
    %45 = vector.multi_reduction <add>, %44, %cst_18 [1] : vector<8x256xf32> to vector<8xf32>
    %46 = vector.shape_cast %45 : vector<8xf32> to vector<8x1xf32>
    %cst_19 = arith.constant 2.560000e+02 : f32
    %47 = vector.broadcast %cst_19 : f32 to vector<8x1xf32>
    %48 = arith.divf %46, %47 : vector<8x1xf32>
    %49 = arith.mulf %44, %44 : vector<8x256xf32>
    %cst_20 = arith.constant dense<0.000000e+00> : vector<8xf32>
    %50 = vector.multi_reduction <add>, %49, %cst_20 [1] : vector<8x256xf32> to vector<8xf32>
    %51 = vector.shape_cast %50 : vector<8xf32> to vector<8x1xf32>
    %cst_21 = arith.constant 2.560000e+02 : f32
    %52 = vector.broadcast %cst_21 : f32 to vector<8x1xf32>
    %53 = arith.divf %51, %52 : vector<8x1xf32>
    %54 = arith.mulf %48, %48 : vector<8x1xf32>
    %55 = arith.subf %53, %54 : vector<8x1xf32>
    %cst_22 = arith.constant 0.000000e+00 : f32
    %56 = vector.broadcast %cst_22 : f32 to vector<8x1xf32>
    %57 = arith.maximumf %55, %56 : vector<8x1xf32>
    %58 = vector.broadcast %48 : vector<8x1xf32> to vector<8x256xf32>
    %59 = arith.subf %44, %58 : vector<8x256xf32>
    %cst_23 = arith.constant 9.99999974E-6 : f32
    %60 = vector.broadcast %cst_23 : f32 to vector<8x1xf32>
    %61 = arith.addf %57, %60 : vector<8x1xf32>
    %62 = math.rsqrt %61 : vector<8x1xf32>
    %63 = vector.broadcast %62 : vector<8x1xf32> to vector<8x256xf32>
    %64 = arith.mulf %59, %63 : vector<8x256xf32>
    %cst_24 = arith.constant 0.000000e+00 : f32
    %65 = vector.broadcast %cst_24 : f32 to vector<8x256xf32>
    %66 = arith.maximumf %64, %65 : vector<8x256xf32>
    %c1_i32_25 = arith.constant 1 : i32
    %67 = tpu.dynamic_rotate %66 by %c1_i32_25 dim 1 : vector<8x256xf32>, i32 -> vector<8x256xf32>
    %cst_26 = arith.constant 0.000000e+00 : f32
    %68 = vector.shape_cast %10 : vector<1x256xi1> to vector<1x256xi1>
    %69 = vector.broadcast %68 : vector<1x256xi1> to vector<8x256xi1>
    %70 = vector.broadcast %cst_26 : f32 to vector<8x256xf32>
    %71 = arith.select %69, %67, %70 : vector<8x256xi1>, vector<8x256xf32>
    %c255_i32_27 = arith.constant 255 : i32
    %72 = tpu.dynamic_rotate %66 by %c255_i32_27 dim 1 : vector<8x256xf32>, i32 -> vector<8x256xf32>
    %cst_28 = arith.constant 0.000000e+00 : f32
    %73 = vector.shape_cast %12 : vector<1x256xi1> to vector<1x256xi1>
    %74 = vector.broadcast %73 : vector<1x256xi1> to vector<8x256xi1>
    %75 = vector.broadcast %cst_28 : f32 to vector<8x256xf32>
    %76 = arith.select %74, %72, %75 : vector<8x256xi1>, vector<8x256xf32>
    %77 = tpu.concatenate %71, %66, %76 in 0 : vector<8x256xf32>, vector<8x256xf32>, vector<8x256xf32> -> vector<24x256xf32>
    %c0_29 = arith.constant 0 : index
    %c0_30 = arith.constant 0 : index
    %c0_31 = arith.constant 0 : index
    %78 = vector.load %arg3[%c0_29, %c0_30, %c0_31] : memref<3x8x24xf32, #tpu.memory_space<vmem>>, vector<1x8x24xf32>
    %79 = vector.shape_cast %78 : vector<1x8x24xf32> to vector<8x24xf32>
    %cst_32 = arith.constant dense<0.000000e+00> : vector<8x256xf32>
    %80 = tpu.matmul %79, %77, %cst_32 {dimension_numbers = #tpu.dot_dimension_numbers<[1], [0], [0], [1], [0, 0, 1, 1], [], []>} : vector<8x24xf32>, vector<24x256xf32>, vector<8x256xf32> -> vector<8x256xf32>
    %c1_33 = arith.constant 1 : index
    %c0_34 = arith.constant 0 : index
    %c0_35 = arith.constant 0 : index
    %81 = vector.load %arg3[%c1_33, %c0_34, %c0_35] : memref<3x8x24xf32, #tpu.memory_space<vmem>>, vector<1x8x24xf32>
    %82 = vector.shape_cast %81 : vector<1x8x24xf32> to vector<8x24xf32>
    %cst_36 = arith.constant dense<0.000000e+00> : vector<8x256xf32>
    %83 = tpu.matmul %82, %77, %cst_36 {dimension_numbers = #tpu.dot_dimension_numbers<[1], [0], [0], [1], [0, 0, 1, 1], [], []>} : vector<8x24xf32>, vector<24x256xf32>, vector<8x256xf32> -> vector<8x256xf32>
    %c2_37 = arith.constant 2 : index
    %c0_38 = arith.constant 0 : index
    %c0_39 = arith.constant 0 : index
    %84 = vector.load %arg3[%c2_37, %c0_38, %c0_39] : memref<3x8x24xf32, #tpu.memory_space<vmem>>, vector<1x8x24xf32>
    %85 = vector.shape_cast %84 : vector<1x8x24xf32> to vector<8x24xf32>
    %cst_40 = arith.constant dense<0.000000e+00> : vector<8x256xf32>
    %86 = tpu.matmul %85, %77, %cst_40 {dimension_numbers = #tpu.dot_dimension_numbers<[1], [0], [0], [1], [0, 0, 1, 1], [], []>} : vector<8x24xf32>, vector<24x256xf32>, vector<8x256xf32> -> vector<8x256xf32>
    %c16_i32_41 = arith.constant 16 : i32
    %87 = tpu.dynamic_rotate %80 by %c16_i32_41 dim 1 : vector<8x256xf32>, i32 -> vector<8x256xf32>
    %cst_42 = arith.constant 0.000000e+00 : f32
    %88 = vector.shape_cast %6 : vector<1x256xi1> to vector<1x256xi1>
    %89 = vector.broadcast %88 : vector<1x256xi1> to vector<8x256xi1>
    %90 = vector.broadcast %cst_42 : f32 to vector<8x256xf32>
    %91 = arith.select %89, %87, %90 : vector<8x256xi1>, vector<8x256xf32>
    %92 = arith.addf %83, %91 : vector<8x256xf32>
    %c240_i32_43 = arith.constant 240 : i32
    %93 = tpu.dynamic_rotate %86 by %c240_i32_43 dim 1 : vector<8x256xf32>, i32 -> vector<8x256xf32>
    %cst_44 = arith.constant 0.000000e+00 : f32
    %94 = vector.shape_cast %8 : vector<1x256xi1> to vector<1x256xi1>
    %95 = vector.broadcast %94 : vector<1x256xi1> to vector<8x256xi1>
    %96 = vector.broadcast %cst_44 : f32 to vector<8x256xf32>
    %97 = arith.select %95, %93, %96 : vector<8x256xi1>, vector<8x256xf32>
    %98 = arith.addf %92, %97 : vector<8x256xf32>
    %cst_45 = arith.constant dense<0.000000e+00> : vector<8xf32>
    %99 = vector.multi_reduction <add>, %98, %cst_45 [1] : vector<8x256xf32> to vector<8xf32>
    %100 = vector.shape_cast %99 : vector<8xf32> to vector<8x1xf32>
    %cst_46 = arith.constant 2.560000e+02 : f32
    %101 = vector.broadcast %cst_46 : f32 to vector<8x1xf32>
    %102 = arith.divf %100, %101 : vector<8x1xf32>
    %103 = arith.mulf %98, %98 : vector<8x256xf32>
    %cst_47 = arith.constant dense<0.000000e+00> : vector<8xf32>
    %104 = vector.multi_reduction <add>, %103, %cst_47 [1] : vector<8x256xf32> to vector<8xf32>
    %105 = vector.shape_cast %104 : vector<8xf32> to vector<8x1xf32>
    %cst_48 = arith.constant 2.560000e+02 : f32
    %106 = vector.broadcast %cst_48 : f32 to vector<8x1xf32>
    %107 = arith.divf %105, %106 : vector<8x1xf32>
    %108 = arith.mulf %102, %102 : vector<8x1xf32>
    %109 = arith.subf %107, %108 : vector<8x1xf32>
    %cst_49 = arith.constant 0.000000e+00 : f32
    %110 = vector.broadcast %cst_49 : f32 to vector<8x1xf32>
    %111 = arith.maximumf %109, %110 : vector<8x1xf32>
    %112 = vector.broadcast %102 : vector<8x1xf32> to vector<8x256xf32>
    %113 = arith.subf %98, %112 : vector<8x256xf32>
    %cst_50 = arith.constant 9.99999974E-6 : f32
    %114 = vector.broadcast %cst_50 : f32 to vector<8x1xf32>
    %115 = arith.addf %111, %114 : vector<8x1xf32>
    %116 = math.rsqrt %115 : vector<8x1xf32>
    %117 = vector.broadcast %116 : vector<8x1xf32> to vector<8x256xf32>
    %118 = arith.mulf %113, %117 : vector<8x256xf32>
    %119 = arith.addf %1, %118 : vector<8x256xf32>
    %c0_51 = arith.constant 0 : index
    %c0_52 = arith.constant 0 : index
    %c0_53 = arith.constant 0 : index
    %120 = vector.load %arg4[%c0_51, %c0_52, %c0_53] : memref<1x8x256xf32, #tpu.memory_space<vmem>>, vector<1x8x256xf32>
    %121 = vector.shape_cast %120 : vector<1x8x256xf32> to vector<8x256xf32>
    %122 = vector.shape_cast %119 : vector<8x256xf32> to vector<1x8x256xf32>
    tpu.vector_store %arg4[%c0_51, %c0_52, %c0_53], %122 {strides = array<i32>} : memref<1x8x256xf32, #tpu.memory_space<vmem>>, vector<1x8x256xf32>,
    return
  }
  func.func @transform_0(%arg0: i32) -> (i32, i32, i32) {
    %c0_i32 = arith.constant 0 : i32
    %c0_i32_0 = arith.constant 0 : i32
    %c0_i32_1 = arith.constant 0 : i32
    return %arg0, %c0_i32, %c0_i32_0 : i32, i32, i32
  }
  func.func @transform_1(%arg0: i32) -> (i32, i32, i32) {
    %c0_i32 = arith.constant 0 : i32
    %c0_i32_0 = arith.constant 0 : i32
    %c0_i32_1 = arith.constant 0 : i32
    %c0_i32_2 = arith.constant 0 : i32
    return %c0_i32, %c0_i32_0, %c0_i32_1 : i32, i32, i32
  }
  func.func @transform_2(%arg0: i32) -> (i32, i32, i32) {
    %c0_i32 = arith.constant 0 : i32
    %c0_i32_0 = arith.constant 0 : i32
    %c0_i32_1 = arith.constant 0 : i32
    %c0_i32_2 = arith.constant 0 : i32
    return %c0_i32, %c0_i32_0, %c0_i32_1 : i32, i32, i32
  }
  func.func @transform_3(%arg0: i32) -> (i32, i32, i32) {
    %c0_i32 = arith.constant 0 : i32
    %c0_i32_0 = arith.constant 0 : i32
    %c0_i32_1 = arith.constant 0 : i32
    return %arg0, %c0_i32, %c0_i32_0 : i32, i32, i32
  }
}

</mosaic_0001>

<llo_original>
// kernel: residual_block.1
$region0: #{residual_block.1}
  #allocation0 [shape = 'u32[]', space=smem, size = 0x4, offset = 0x4, fixed_abs, tag = 'smem constant byte address 0x4 - core index']
  #allocation1 [shape = 'u32[72,128]{1,0:T(1,128)}', space=vmem, size = 0x9000, scoped, tag = 'internal scratch']
  %s0 = inlined_call_operand.vmem [shape: f32[2,8,256], index: 0, kind: input, shape index: {}]
  %s1 = inlined_call_operand.vmem [shape: f32[3,8,24], index: 1, kind: input, shape index: {}]
  %s2 = inlined_call_operand.vmem [shape: f32[3,8,24], index: 2, kind: input, shape index: {}]
  %s3 = inlined_call_operand.vmem [shape: f32[2,8,256], index: 3, kind: output, shape index: {}]
  %s4 = sld [smem:[#allocation0]]
  $region45: #{residual_block.1} parent=0
    _
  %s6 = ssub.s32 1, %s4
  %s7 = scalar_select 0, %s6, %s4
  loop: start=0, step=1, limit=4
  $region2: #{residual_block.1} parent=0 // loop_pre_header
    _
  $region3: #{residual_block.1} parent=0 // loop_header
    %s9 = sphi 0, %s13
    %p10 = scmp.ge.s32.totalorder %s9, 4
    %s19 = sphi 0, %s21
    %s22 = sphi 0, %s19
    %s23 = sphi 0, %s22
    %s39 = sphi 0, %s23
    %s43 = sphi 0, %s43
    %s45 = sphi 0, %s43
    %s46 = sphi 0, %s45
    %s60 = sphi 0, %s46
    %s64 = sphi 0, %s64
    %s66 = sphi 0, %s64
    %s67 = sphi 0, %s66
    %s81 = sphi 0, %s67
    %s87 = sphi 0, %s89
    %s90 = sphi 0, %s87
    %s91 = sphi 0, %s90
    %s107 = sphi 0, %s91
  $region4: #{residual_block.1} parent=0 // loop_header_branch
    %12 = sbr.rel (%p10) target = $region8
  $region5: #{residual_block.1} parent=0 // loop_body
    %s14 = ssub.s32 %s9, 1
    %s15 = ssub.s32 %s9, 2
    %s16 = sadd.s32 %s9, 1
    %s17 = ssub.s32 %s9, %s16
    %p18 = scmp.eq.s32.totalorder %s17, 0
    %s20 = sadd.s32 %s19, 1
    %s21 = scalar_select %p18, %s19, %s20
    %p24 = pneg %p18
    %p25 = scmp.eq.s32.totalorder %s9, 1
    %p26 = por %p24, %p25
    %p27 = scmp.ne.s32.totalorder %s19, %s22
    %p28 = scmp.eq.s32.totalorder %s9, 0
    %p29 = por %p27, %p28
    %p30 = scmp.ne.s32.totalorder %s19, %s22
    %p31 = scmp.eq.s32.totalorder %s14, 1
    %p32 = por %p30, %p31
    %p33 = scmp.ne.s32.totalorder %s22, %s23
    %p34 = scmp.eq.s32.totalorder %s14, 0
    %p35 = por %p33, %p34
    %p36 = scmp.ne.s32.totalorder %s22, %s23
    %p37 = scmp.eq.s32.totalorder %s15, 1
    %p38 = por %p36, %p37
    %p40 = scmp.ne.s32.totalorder %s23, %s39
    %p41 = scmp.eq.s32.totalorder %s15, 0
    %p42 = por %p40, %p41
    %s44 = sadd.s32 %s43, 1
    %p47 = scmp.eq.s32.totalorder %s9, 1
    %p48 = scmp.ne.s32.totalorder %s43, %s45
    %p49 = scmp.eq.s32.totalorder %s9, 0
    %p50 = por %p48, %p49
    %p51 = scmp.ne.s32.totalorder %s43, %s45
    %p52 = scmp.eq.s32.totalorder %s14, 1
    %p53 = por %p51, %p52
    %p54 = scmp.ne.s32.totalorder %s45, %s46
    %p55 = scmp.eq.s32.totalorder %s14, 0
    %p56 = por %p54, %p55
    %p57 = scmp.ne.s32.totalorder %s45, %s46
    %p58 = scmp.eq.s32.totalorder %s15, 1
    %p59 = por %p57, %p58
    %p61 = scmp.ne.s32.totalorder %s46, %s60
    %p62 = scmp.eq.s32.totalorder %s15, 0
    %p63 = por %p61, %p62
    %s65 = sadd.s32 %s64, 1
    %p68 = scmp.eq.s32.totalorder %s9, 1
    %p69 = scmp.ne.s32.totalorder %s64, %s66
    %p70 = scmp.eq.s32.totalorder %s9, 0
    %p71 = por %p69, %p70
    %p72 = scmp.ne.s32.totalorder %s64, %s66
    %p73 = scmp.eq.s32.totalorder %s14, 1
    %p74 = por %p72, %p73
    %p75 = scmp.ne.s32.totalorder %s66, %s67
    %p76 = scmp.eq.s32.totalorder %s14, 0
    %p77 = por %p75, %p76
    %p78 = scmp.ne.s32.totalorder %s66, %s67
    %p79 = scmp.eq.s32.totalorder %s15, 1
    %p80 = por %p78, %p79
    %p82 = scmp.ne.s32.totalorder %s67, %s81
    %p83 = scmp.eq.s32.totalorder %s15, 0
    %p84 = por %p82, %p83
    %s85 = ssub.s32 %s9, %s16
    %p86 = scmp.eq.s32.totalorder %s85, 0
    %s88 = sadd.s32 %s87, 1
    %s89 = scalar_select %p86, %s87, %s88
    %p92 = pneg %p86
    %p93 = scmp.eq.s32.totalorder %s9, 1
    %p94 = por %p92, %p93
    %p95 = scmp.ne.s32.totalorder %s87, %s90
    %p96 = scmp.eq.s32.totalorder %s9, 0
    %p97 = por %p95, %p96
    %p98 = scmp.ne.s32.totalorder %s87, %s90
    %p99 = scmp.eq.s32.totalorder %s14, 1
    %p100 = por %p98, %p99
    %p101 = scmp.ne.s32.totalorder %s90, %s91
    %p102 = scmp.eq.s32.totalorder %s14, 0
    %p103 = por %p101, %p102
    %p104 = scmp.ne.s32.totalorder %s90, %s91
    %p105 = scmp.eq.s32.totalorder %s15, 1
    %p106 = por %p104, %p105
    %p108 = scmp.ne.s32.totalorder %s91, %s107
    %p109 = scmp.eq.s32.totalorder %s15, 0
    %p110 = por %p108, %p109
    %p111 = scmp.le.s32.totalorder 1, %s9
    %p112 = scmp.lt.s32.totalorder %s9, 3
    %p113 = pnand %p111, %p112
    %p114 = pneg %p113
    // Predicated region
    $region9: #{residual_block.1} parent=5 // pred_check
      _
    $region10: #{residual_block.1} parent=5 // pred_check_branch
      %116 = sbr.rel (%p113) target = $region12
    $region11: #{residual_block.1} parent=5 // pred_region
      %s117 = ssub.s32 %s9, 1
      // Predicated region
      $region13: #{residual_block.1} parent=11 // pred_check
        %p118 = pneg %p56
      $region14: #{residual_block.1} parent=11 // pred_check_branch
        %120 = sbr.rel (%p118) target = $region16
      $region15: #{residual_block.1} parent=11 // pred_region
        _
      $region16: #{residual_block.1} parent=11 // pred_fallthru
        _
      // Predicated region
      $region17: #{residual_block.1} parent=11 // pred_check
        %p121 = pneg %p77
      $region18: #{residual_block.1} parent=11 // pred_check_branch
        %123 = sbr.rel (%p121) target = $region20
      $region19: #{residual_block.1} parent=11 // pred_region
        _
      $region20: #{residual_block.1} parent=11 // pred_fallthru
        _
    $region12: #{residual_block.1} parent=5 // pred_fallthru
      _
    %p124 = scmp.lt.s32.totalorder %s9, 2
    // Predicated region
    $region21: #{residual_block.1} parent=5 // pred_check
      %p125 = pneg %p124
    $region22: #{residual_block.1} parent=5 // pred_check_branch
      %127 = sbr.rel (%p125) target = $region24
    $region23: #{residual_block.1} parent=5 // pred_region
      // Predicated region
      $region25: #{residual_block.1} parent=23 // pred_check
        %p128 = pneg %p29
      $region26: #{residual_block.1} parent=23 // pred_check_branch
        %130 = sbr.rel (%p128) target = $region28
      $region27: #{residual_block.1} parent=23 // pred_region
        %p131 = scmp.lt.s32.totalorder %s9, 1
        %s132 = scalar_select %p131, %s9, 1
        %s133 = smul.addr %s132, 2
        %s134 = smul.addr %s133, 8
        %s135 = scalar_lea.vmem %s0, %s134
      $region28: #{residual_block.1} parent=23 // pred_fallthru
        _
    $region24: #{residual_block.1} parent=5 // pred_fallthru
      _
    %p136 = scmp.le.s32.totalorder 1, %s9
    %p137 = scmp.lt.s32.totalorder %s9, 3
    %p138 = pnand %p136, %p137
    %p139 = pneg %p138
    // Predicated region
    $region29: #{residual_block.1} parent=5 // pred_check
      _
    $region30: #{residual_block.1} parent=5 // pred_check_branch
      %141 = sbr.rel (%p138) target = $region32
    $region31: #{residual_block.1} parent=5 // pred_region
      %s142 = ssub.s32 %s9, 1
      %p143 = scmp.lt.s32.totalorder %s14, 1
      %s144 = scalar_select %p143, %s14, 1
      %s145 = smul.addr %s144, 2
      %s146 = smul.addr %s145, 8
      %s147 = scalar_lea.vmem %s0, %s146
      %p148 = pneg %p35
      %p149 = pneg %p32
      %p150 = pneg %p56
      %p151 = pneg %p53
      %p152 = pneg %p77
      %p153 = pneg %p74
      %p154 = pneg %p103
      %p155 = pneg %p100
      %p156 = scmp.lt.s32.totalorder %s14, 1
      %s157 = scalar_select %p156, %s14, 1
      %s158 = smul.addr %s157, 2
      %s159 = smul.addr %s158, 8
      %s160 = scalar_lea.vmem %s3, %s159
      %p161 = scmp.lt.s32.totalorder %s14, 1
      %s162 = scalar_select %p161, %s14, 1
      %s163 = smul.addr %s162, 2
      %s164 = smul.addr %s163, 8
      %s165 = scalar_lea.vmem %s0, %s164
      %p166 = scmp.lt.s32.totalorder %s14, 1
      %s167 = scalar_select %p166, %s14, 1
      %s168 = smul.addr %s167, 2
      %s169 = smul.addr %s168, 8
      %s170 = scalar_lea.vmem %s3, %s169
      %v171 = vld [vmem:[%s165] sm:$0xff]
      %v172 = vld [vmem:[%s165 + $0x8] sm:$0xff]
      %v173 = vlaneseq
      %v174 = vand.u32 %v173, 127
      %v175 = vadd.s32 %v174, 128
      %v176 = vand.u32 %v174, 15
      %v177 = vand.u32 %v175, 15
      %vm178 = vcmp.ge.s32.totalorder %v174, 16
      %vm179 = vcmp.ge.s32.totalorder %v175, 16
      %vm180 = vcmp.lt.s32.totalorder %v174, 240
      %vm181 = vcmp.lt.s32.totalorder %v175, 240
      %vm182 = vcmp.ge.s32.totalorder %v176, 1
      %vm183 = vcmp.ge.s32.totalorder %v177, 1
      %vm184 = vcmp.le.s32.totalorder %v176, 14
      %vm185 = vcmp.le.s32.totalorder %v177, 14
      %186 = vrot.lane.b32.xlu0 %v171, 1
      %v187 = vpop.permute.xlu0 %186
      %188 = vrot.lane.b32.xlu0 %v172, 1
      %v189 = vpop.permute.xlu0 %188
      %vm190 = vcmp.lt.s32.totalorder %v174, 1
      %v191 = vsel %vm190, %v187, %v189
      %v192 = vsel %vm190, %v189, %v187
      %v193 = vsel %vm182, 1, 0
      %v194 = vsel %vm183, 1, 0
      %vm195 = vcmp.eq.s32.totalorder %v193, 1
      %vm196 = vcmp.eq.s32.totalorder %v194, 1
      %v197 = vsel %vm195, %v192, 0.0
      %v198 = vsel %vm196, %v191, 0.0
      %199 = vrot.lane.b32.xlu0 %v171, 127
      %v200 = vpop.permute.xlu0 %199
      %201 = vrot.lane.b32.xlu0 %v172, 127
      %v202 = vpop.permute.xlu0 %201
      %vm203 = vcmp.lt.s32.totalorder %v174, 127
      %v204 = vsel %vm203, %v200, %v202
      %v205 = vsel %vm203, %v202, %v200
      %v206 = vsel %vm184, 1, 0
      %v207 = vsel %vm185, 1, 0
      %vm208 = vcmp.eq.s32.totalorder %v206, 1
      %vm209 = vcmp.eq.s32.totalorder %v207, 1
      %v210 = vsel %vm208, %v204, 0.0
      %v211 = vsel %vm209, %v205, 0.0
      %v212 = vld [vmem:[%s1] sm:$0xff]
      %vm213 = vcmask 195584
      %v215 = vsel %vm213, %v212, 0
      %217 = vmatpush.msra.mxu0 0.0
      %218 = vmatpush.msra.mxu0 0.0
      %219 = vmatpush.msra.mxu0 0.0
      %220 = vmatpush.msra.mxu0 0.0
      %221 = vmatpush.msra.mxu0 0.0
      %222 = vmatpush.msra.mxu0 0.0
      %223 = vmatpush.msra.mxu0 0.0
      %224 = vmatpush.msra.mxu0 0.0
      %225 = vmatpush.msra.mxu0 0.0
      %226 = vmatpush.msra.mxu0 0.0
      %227 = vmatpush.msra.mxu0 0.0
      %228 = vmatpush.msra.mxu0 0.0
      %229 = vmatpush.msra.mxu0 0.0
      %230 = vmatpush.msra.mxu0 %v210
      %231 = vmatpush.msra.mxu0 %v171
      %232 = vmatpush.msra.mxu0 %v197
      %233 = vmatmul.f32.gmra.mxu0 %v215
      %v234 = vpop.f32.mrf.mxu0
      %v235 = vadd.f32 0.0, %v234
      %236 = vdwg.mxu0
      %237 = vmatpush.msra.mxu0 0.0
      %238 = vmatpush.msra.mxu0 0.0
      %239 = vmatpush.msra.mxu0 0.0
      %240 = vmatpush.msra.mxu0 0.0
      %241 = vmatpush.msra.mxu0 0.0
      %242 = vmatpush.msra.mxu0 0.0
      %243 = vmatpush.msra.mxu0 0.0
      %244 = vmatpush.msra.mxu0 0.0
      %245 = vmatpush.msra.mxu0 0.0
      %246 = vmatpush.msra.mxu0 0.0
      %247 = vmatpush.msra.mxu0 0.0
      %248 = vmatpush.msra.mxu0 0.0
      %249 = vmatpush.msra.mxu0 0.0
      %250 = vmatpush.msra.mxu0 %v211
      %251 = vmatpush.msra.mxu0 %v172
      %252 = vmatpush.msra.mxu0 %v198
      %253 = vmatmul.f32.gmra.mxu0 %v215
      %v254 = vpop.f32.mrf.mxu0
      %v255 = vadd.f32 0.0, %v254
      %256 = vdwg.mxu0
      %s257 = scalar_lea.vmem %s1, 8
      %v258 = vld [vmem:[%s257] sm:$0xff]
      %s259 = scalar_lea.vmem %s1, 16
      %v260 = vld [vmem:[%s259] sm:$0xff]
      %v262 = vsel %vm213, %v260, 0
      %264 = vmatpush.msra.mxu0 0.0
      %265 = vmatpush.msra.mxu0 0.0
      %266 = vmatpush.msra.mxu0 0.0
      %267 = vmatpush.msra.mxu0 0.0
      %268 = vmatpush.msra.mxu0 0.0
      %269 = vmatpush.msra.mxu0 0.0
      %270 = vmatpush.msra.mxu0 0.0
      %271 = vmatpush.msra.mxu0 0.0
      %272 = vmatpush.msra.mxu0 0.0
      %273 = vmatpush.msra.mxu0 0.0
      %274 = vmatpush.msra.mxu0 0.0
      %275 = vmatpush.msra.mxu0 0.0
      %276 = vmatpush.msra.mxu0 0.0
      %277 = vmatpush.msra.mxu0 %v210
      %278 = vmatpush.msra.mxu0 %v171
      %279 = vmatpush.msra.mxu0 %v197
      %280 = vmatmul.f32.gmra.mxu0 %v262
      %v281 = vpop.f32.mrf.mxu0
      %v282 = vadd.f32 0.0, %v281
      %283 = vdwg.mxu0
      %284 = vmatpush.msra.mxu0 0.0
      %285 = vmatpush.msra.mxu0 0.0
      %286 = vmatpush.msra.mxu0 0.0
      %287 = vmatpush.msra.mxu0 0.0
      %288 = vmatpush.msra.mxu0 0.0
      %289 = vmatpush.msra.mxu0 0.0
      %290 = vmatpush.msra.mxu0 0.0
      %291 = vmatpush.msra.mxu0 0.0
      %292 = vmatpush.msra.mxu0 0.0
      %293 = vmatpush.msra.mxu0 0.0
      %294 = vmatpush.msra.mxu0 0.0
      %295 = vmatpush.msra.mxu0 0.0
      %296 = vmatpush.msra.mxu0 0.0
      %297 = vmatpush.msra.mxu0 %v211
      %298 = vmatpush.msra.mxu0 %v172
      %299 = vmatpush.msra.mxu0 %v198
      %300 = vmatmul.f32.gmra.mxu0 %v262
      %v301 = vpop.f32.mrf.mxu0
      %v302 = vadd.f32 0.0, %v301
      %303 = vdwg.mxu0
      %304 = vrot.lane.b32.xlu0 %v235, 16
      %v305 = vpop.permute.xlu0 %304
      %306 = vrot.lane.b32.xlu0 %v255, 16
      %v307 = vpop.permute.xlu0 %306
      %vm308 = vcmp.lt.s32.totalorder %v174, 16
      %v309 = vsel %vm308, %v305, %v307
      %v310 = vsel %vm308, %v307, %v305
      %v311 = vsel %vm178, 1, 0
      %v312 = vsel %vm179, 1, 0
      %vm313 = vcmp.eq.s32.totalorder %v311, 1
      %vm314 = vcmp.eq.s32.totalorder %v312, 1
      %v315 = vsel %vm313, %v310, 0.0
      %v316 = vsel %vm314, %v309, 0.0
      %v318 = vsel %vm213, %v258, 0
      %320 = vmatpush.msra.mxu0 0.0
      %321 = vmatpush.msra.mxu0 0.0
      %322 = vmatpush.msra.mxu0 0.0
      %323 = vmatpush.msra.mxu0 0.0
      %324 = vmatpush.msra.mxu0 0.0
      %325 = vmatpush.msra.mxu0 0.0
      %326 = vmatpush.msra.mxu0 0.0
      %327 = vmatpush.msra.mxu0 0.0
      %328 = vmatpush.msra.mxu0 0.0
      %329 = vmatpush.msra.mxu0 0.0
      %330 = vmatpush.msra.mxu0 0.0
      %331 = vmatpush.msra.mxu0 0.0
      %332 = vmatpush.msra.mxu0 0.0
      %333 = vmatpush.msra.mxu0 %v210
      %334 = vmatpush.msra.mxu0 %v171
      %335 = vmatpush.msra.mxu0 %v197
      %336 = vmatmul.f32.gmra.mxu0 %v318
      %v337 = vpop.f32.mrf.mxu0
      %v338 = vadd.f32 %v315, %v337
      %339 = vdwg.mxu0
      %340 = vmatpush.msra.mxu0 0.0
      %341 = vmatpush.msra.mxu0 0.0
      %342 = vmatpush.msra.mxu0 0.0
      %343 = vmatpush.msra.mxu0 0.0
      %344 = vmatpush.msra.mxu0 0.0
      %345 = vmatpush.msra.mxu0 0.0
      %346 = vmatpush.msra.mxu0 0.0
      %347 = vmatpush.msra.mxu0 0.0
      %348 = vmatpush.msra.mxu0 0.0
      %349 = vmatpush.msra.mxu0 0.0
      %350 = vmatpush.msra.mxu0 0.0
      %351 = vmatpush.msra.mxu0 0.0
      %352 = vmatpush.msra.mxu0 0.0
      %353 = vmatpush.msra.mxu0 %v211
      %354 = vmatpush.msra.mxu0 %v172
      %355 = vmatpush.msra.mxu0 %v198
      %356 = vmatmul.f32.gmra.mxu0 %v318
      %v357 = vpop.f32.mrf.mxu0
      %v358 = vadd.f32 %v316, %v357
      %359 = vdwg.mxu0
      %360 = vrot.lane.b32.xlu0 %v282, 112
      %v361 = vpop.permute.xlu0 %360
      %362 = vrot.lane.b32.xlu0 %v302, 112
      %v363 = vpop.permute.xlu0 %362
      %vm364 = vcmp.lt.s32.totalorder %v174, 112
      %v365 = vsel %vm364, %v361, %v363
      %v366 = vsel %vm364, %v363, %v361
      %v367 = vsel %vm180, 1, 0
      %v368 = vsel %vm181, 1, 0
      %vm369 = vcmp.eq.s32.totalorder %v367, 1
      %vm370 = vcmp.eq.s32.totalorder %v368, 1
      %v371 = vsel %vm369, %v365, 0.0
      %v372 = vsel %vm370, %v366, 0.0
      %v373 = vadd.f32 %v338, %v371
      %v374 = vadd.f32 %v358, %v372
      %v375 = vadd.f32 %v373, %v374
      %376 = vadd.xlane.f32.xlu0 %v375
      %v377 = vpop.xlane.xlu0 %376
      %v378 = vrcp.pop 256.0
      %v379 = vmul.f32 256.0, %v378
      %v380 = vsub.f32 1.0, %v379
      %v381 = vmul.f32 %v378, %v380
      %v382 = vadd.f32 %v378, %v381
      %vm383 = vweird.f32 %v378
      %v384 = vsel %vm383, %v378, %v382
      %v385 = vmul.f32 %v377, %v384
      %v386 = vmul.f32 %v373, %v373
      %v387 = vmul.f32 %v374, %v374
      %v388 = vadd.f32 %v386, %v387
      %389 = vadd.xlane.f32.xlu0 %v388
      %v390 = vpop.xlane.xlu0 %389
      %v391 = vmul.f32 %v390, %v384
      %v392 = vmul.f32 %v385, %v385
      %v393 = vsub.f32 %v391, %v392
      %v394 = vmax.f32 %v393, 0.0
      %v395 = vsub.f32 %v373, %v385
      %v396 = vsub.f32 %v374, %v385
      %v397 = vadd.f32 %v394, 1e-05
      %v398 = vrsqrt.pop %v397
      %v399 = vmul.f32 %v398, %v397
      %v400 = vmul.f32 %v399, %v398
      %v401 = vmul.f32 0.5, %v400
      %v402 = vsub.f32 1.5, %v401
      %v403 = vmul.f32 %v398, %v402
      %vm404 = vweird.f32 %v397
      %vm405 = vweird.f32 %v398
      %vm406 = vmor %vm404, %vm405
      %v407 = vsel %vm406, %v398, %v403
      %v408 = vmul.f32 %v395, %v407
      %v409 = vmul.f32 %v396, %v407
      %v410 = vmax.f32 %v408, 0.0
      %v411 = vmax.f32 %v409, 0.0
      %412 = vrot.lane.b32.xlu0 %v410, 1
      %v413 = vpop.permute.xlu0 %412
      %414 = vrot.lane.b32.xlu0 %v411, 1
      %v415 = vpop.permute.xlu0 %414
      %v416 = vsel %vm190, %v413, %v415
      %v417 = vsel %vm190, %v415, %v413
      %v418 = vsel %vm195, %v417, 0.0
      %v419 = vsel %vm196, %v416, 0.0
      %420 = vrot.lane.b32.xlu0 %v410, 127
      %v421 = vpop.permute.xlu0 %420
      %422 = vrot.lane.b32.xlu0 %v411, 127
      %v423 = vpop.permute.xlu0 %422
      %v424 = vsel %vm203, %v421, %v423
      %v425 = vsel %vm203, %v423, %v421
      %v426 = vsel %vm208, %v424, 0.0
      %v427 = vsel %vm209, %v425, 0.0
      %v428 = vld [vmem:[%s2] sm:$0xff]
      %v430 = vsel %vm213, %v428, 0
      %432 = vmatpush.msra.mxu0 0.0
      %433 = vmatpush.msra.mxu0 0.0
      %434 = vmatpush.msra.mxu0 0.0
      %435 = vmatpush.msra.mxu0 0.0
      %436 = vmatpush.msra.mxu0 0.0
      %437 = vmatpush.msra.mxu0 0.0
      %438 = vmatpush.msra.mxu0 0.0
      %439 = vmatpush.msra.mxu0 0.0
      %440 = vmatpush.msra.mxu0 0.0
      %441 = vmatpush.msra.mxu0 0.0
      %442 = vmatpush.msra.mxu0 0.0
      %443 = vmatpush.msra.mxu0 0.0
      %444 = vmatpush.msra.mxu0 0.0
      %445 = vmatpush.msra.mxu0 %v426
      %446 = vmatpush.msra.mxu0 %v410
      %447 = vmatpush.msra.mxu0 %v418
      %448 = vmatmul.f32.gmra.mxu0 %v430
      %v449 = vpop.f32.mrf.mxu0
      %v450 = vadd.f32 0.0, %v449
      %451 = vdwg.mxu0
      %452 = vmatpush.msra.mxu0 0.0
      %453 = vmatpush.msra.mxu0 0.0
      %454 = vmatpush.msra.mxu0 0.0
      %455 = vmatpush.msra.mxu0 0.0
      %456 = vmatpush.msra.mxu0 0.0
      %457 = vmatpush.msra.mxu0 0.0
      %458 = vmatpush.msra.mxu0 0.0
      %459 = vmatpush.msra.mxu0 0.0
      %460 = vmatpush.msra.mxu0 0.0
      %461 = vmatpush.msra.mxu0 0.0
      %462 = vmatpush.msra.mxu0 0.0
      %463 = vmatpush.msra.mxu0 0.0
      %464 = vmatpush.msra.mxu0 0.0
      %465 = vmatpush.msra.mxu0 %v427
      %466 = vmatpush.msra.mxu0 %v411
      %467 = vmatpush.msra.mxu0 %v419
      %468 = vmatmul.f32.gmra.mxu0 %v430
      %v469 = vpop.f32.mrf.mxu0
      %v470 = vadd.f32 0.0, %v469
      %471 = vdwg.mxu0
      %s472 = scalar_lea.vmem %s2, 8
      %v473 = vld [vmem:[%s472] sm:$0xff]
      %s474 = scalar_lea.vmem %s2, 16
      %v475 = vld [vmem:[%s474] sm:$0xff]
      %v477 = vsel %vm213, %v475, 0
      %479 = vmatpush.msra.mxu0 0.0
      %480 = vmatpush.msra.mxu0 0.0
      %481 = vmatpush.msra.mxu0 0.0
      %482 = vmatpush.msra.mxu0 0.0
      %483 = vmatpush.msra.mxu0 0.0
      %484 = vmatpush.msra.mxu0 0.0
      %485 = vmatpush.msra.mxu0 0.0
      %486 = vmatpush.msra.mxu0 0.0
      %487 = vmatpush.msra.mxu0 0.0
      %488 = vmatpush.msra.mxu0 0.0
      %489 = vmatpush.msra.mxu0 0.0
      %490 = vmatpush.msra.mxu0 0.0
      %491 = vmatpush.msra.mxu0 0.0
      %492 = vmatpush.msra.mxu0 %v426
      %493 = vmatpush.msra.mxu0 %v410
      %494 = vmatpush.msra.mxu0 %v418
      %495 = vmatmul.f32.gmra.mxu0 %v477
      %v496 = vpop.f32.mrf.mxu0
      %v497 = vadd.f32 0.0, %v496
      %498 = vdwg.mxu0
      %499 = vmatpush.msra.mxu0 0.0
      %500 = vmatpush.msra.mxu0 0.0
      %501 = vmatpush.msra.mxu0 0.0
      %502 = vmatpush.msra.mxu0 0.0
      %503 = vmatpush.msra.mxu0 0.0
      %504 = vmatpush.msra.mxu0 0.0
      %505 = vmatpush.msra.mxu0 0.0
      %506 = vmatpush.msra.mxu0 0.0
      %507 = vmatpush.msra.mxu0 0.0
      %508 = vmatpush.msra.mxu0 0.0
      %509 = vmatpush.msra.mxu0 0.0
      %510 = vmatpush.msra.mxu0 0.0
      %511 = vmatpush.msra.mxu0 0.0
      %512 = vmatpush.msra.mxu0 %v427
      %513 = vmatpush.msra.mxu0 %v411
      %514 = vmatpush.msra.mxu0 %v419
      %515 = vmatmul.f32.gmra.mxu0 %v477
      %v516 = vpop.f32.mrf.mxu0
      %v517 = vadd.f32 0.0, %v516
      %518 = vdwg.mxu0
      %519 = vrot.lane.b32.xlu0 %v450, 16
      %v520 = vpop.permute.xlu0 %519
      %521 = vrot.lane.b32.xlu0 %v470, 16
      %v522 = vpop.permute.xlu0 %521
      %v523 = vsel %vm308, %v520, %v522
      %v524 = vsel %vm308, %v522, %v520
      %v525 = vsel %vm313, %v524, 0.0
      %v526 = vsel %vm314, %v523, 0.0
      %v528 = vsel %vm213, %v473, 0
      %530 = vmatpush.msra.mxu0 0.0
      %531 = vmatpush.msra.mxu0 0.0
      %532 = vmatpush.msra.mxu0 0.0
      %533 = vmatpush.msra.mxu0 0.0
      %534 = vmatpush.msra.mxu0 0.0
      %535 = vmatpush.msra.mxu0 0.0
      %536 = vmatpush.msra.mxu0 0.0
      %537 = vmatpush.msra.mxu0 0.0
      %538 = vmatpush.msra.mxu0 0.0
      %539 = vmatpush.msra.mxu0 0.0
      %540 = vmatpush.msra.mxu0 0.0
      %541 = vmatpush.msra.mxu0 0.0
      %542 = vmatpush.msra.mxu0 0.0
      %543 = vmatpush.msra.mxu0 %v426
      %544 = vmatpush.msra.mxu0 %v410
      %545 = vmatpush.msra.mxu0 %v418
      %546 = vmatmul.f32.gmra.mxu0 %v528
      %v547 = vpop.f32.mrf.mxu0
      %v548 = vadd.f32 %v525, %v547
      %549 = vdwg.mxu0
      %550 = vmatpush.msra.mxu0 0.0
      %551 = vmatpush.msra.mxu0 0.0
      %552 = vmatpush.msra.mxu0 0.0
      %553 = vmatpush.msra.mxu0 0.0
      %554 = vmatpush.msra.mxu0 0.0
      %555 = vmatpush.msra.mxu0 0.0
      %556 = vmatpush.msra.mxu0 0.0
      %557 = vmatpush.msra.mxu0 0.0
      %558 = vmatpush.msra.mxu0 0.0
      %559 = vmatpush.msra.mxu0 0.0
      %560 = vmatpush.msra.mxu0 0.0
      %561 = vmatpush.msra.mxu0 0.0
      %562 = vmatpush.msra.mxu0 0.0
      %563 = vmatpush.msra.mxu0 %v427
      %564 = vmatpush.msra.mxu0 %v411
      %565 = vmatpush.msra.mxu0 %v419
      %566 = vmatmul.f32.gmra.mxu0 %v528
      %v567 = vpop.f32.mrf.mxu0
      %v568 = vadd.f32 %v526, %v567
      %569 = vdwg.mxu0
      %570 = vrot.lane.b32.xlu0 %v497, 112
      %v571 = vpop.permute.xlu0 %570
      %572 = vrot.lane.b32.xlu0 %v517, 112
      %v573 = vpop.permute.xlu0 %572
      %v574 = vsel %vm364, %v571, %v573
      %v575 = vsel %vm364, %v573, %v571
      %v576 = vsel %vm369, %v574, 0.0
      %v577 = vsel %vm370, %v575, 0.0
      %v578 = vadd.f32 %v548, %v576
      %v579 = vadd.f32 %v568, %v577
      %v580 = vadd.f32 %v578, %v579
      %581 = vadd.xlane.f32.xlu0 %v580
      %v582 = vpop.xlane.xlu0 %581
      %v583 = vmul.f32 %v582, %v384
      %v584 = vmul.f32 %v578, %v578
      %v585 = vmul.f32 %v579, %v579
      %v586 = vadd.f32 %v584, %v585
      %587 = vadd.xlane.f32.xlu0 %v586
      %v588 = vpop.xlane.xlu0 %587
      %v589 = vmul.f32 %v588, %v384
      %v590 = vmul.f32 %v583, %v583
      %v591 = vsub.f32 %v589, %v590
      %v592 = vmax.f32 %v591, 0.0
      %v593 = vsub.f32 %v578, %v583
      %v594 = vsub.f32 %v579, %v583
      %v595 = vadd.f32 %v592, 1e-05
      %v596 = vrsqrt.pop %v595
      %v597 = vmul.f32 %v596, %v595
      %v598 = vmul.f32 %v597, %v596
      %v599 = vmul.f32 0.5, %v598
      %v600 = vsub.f32 1.5, %v599
      %v601 = vmul.f32 %v596, %v600
      %vm602 = vweird.f32 %v595
      %vm603 = vweird.f32 %v596
      %vm604 = vmor %vm602, %vm603
      %v605 = vsel %vm604, %v596, %v601
      %v606 = vmul.f32 %v593, %v605
      %v607 = vmul.f32 %v594, %v605
      %v608 = vadd.f32 %v171, %v606
      %v609 = vadd.f32 %v172, %v607
      %610 = vst [vmem:[%s170] sm:$0xff] %v608
      %611 = vst [vmem:[%s170 + $0x8] sm:$0xff] %v609
      %p612 = scmp.lt.s32.totalorder %s14, 1
      %s613 = scalar_select %p612, %s14, 1
      %s614 = smul.addr %s613, 2
      %s615 = smul.addr %s614, 8
      %s616 = scalar_lea.vmem %s3, %s615
      // Predicated region
      $region33: #{residual_block.1} parent=31 // pred_check
        %p617 = pneg %p100
      $region34: #{residual_block.1} parent=31 // pred_check_branch
        %619 = sbr.rel (%p617) target = $region36
      $region35: #{residual_block.1} parent=31 // pred_region
        _
      $region36: #{residual_block.1} parent=31 // pred_fallthru
        _
    $region32: #{residual_block.1} parent=5 // pred_fallthru
      _
    %p620 = scmp.le.s32.totalorder 2, %s9
    // Predicated region
    $region37: #{residual_block.1} parent=5 // pred_check
      %p621 = pneg %p620
    $region38: #{residual_block.1} parent=5 // pred_check_branch
      %623 = sbr.rel (%p621) target = $region40
    $region39: #{residual_block.1} parent=5 // pred_region
      %s624 = ssub.s32 %s9, 2
      // Predicated region
      $region41: #{residual_block.1} parent=39 // pred_check
        %p625 = pneg %p106
      $region42: #{residual_block.1} parent=39 // pred_check_branch
        %627 = sbr.rel (%p625) target = $region44
      $region43: #{residual_block.1} parent=39 // pred_region
        %p628 = scmp.lt.s32.totalorder %s15, 1
        %s629 = scalar_select %p628, %s15, 1
        %s630 = smul.addr %s629, 2
        %s631 = smul.addr %s630, 8
        %s632 = scalar_lea.vmem %s3, %s631
      $region44: #{residual_block.1} parent=39 // pred_fallthru
        _
    $region40: #{residual_block.1} parent=5 // pred_fallthru
      _
  $region6: #{residual_block.1} parent=0 // loop_footer
    %s13 = sadd.s32 1, %s9
  $region7: #{residual_block.1} parent=0 // loop_footer_branch
    %8 = sbr.rel target = $region3
  $region8: #{residual_block.1} parent=0 // loop_exit
    _

</llo_original>
